<compile_context>
chip_gen: v6e
topology: v6e:2x2x1
jax: 0.10.0
libtpu: 0.0.40
codegen_flags: <defaults>
</compile_context>

<pallas_src>
import jax
import jax.numpy as jnp
from jax.experimental import pallas as pl
from jax.experimental.pallas import tpu as pltpu


def _round_up(x: int, m: int) -> int:
    return (x + m - 1) // m * m


def _encoder_kernel(x_ref, w_ref, b_ref, o_ref):
    """out[i, j] (+)= x[i, k] @ w[k, j], bias folded into the k==0 init.

    x_ref: (TILE_N, TILE_K) bf16   w_ref: (TILE_K, TILE_E) bf16
    b_ref: (1, TILE_E)      f32    o_ref: (TILE_N, TILE_E) accumulator/output
    The out BlockSpec index map (i, j) is constant across the innermost k
    grid axis, so o_ref stays resident in VMEM and serves as the accumulator
    (no scratch buffer, no finalize copy).
    """
    @pl.when(pl.program_id(2) == 0)
    def _():
        o_ref[...] = jnp.broadcast_to(b_ref[...], o_ref.shape).astype(o_ref.dtype)

    o_ref[...] += jnp.dot(
        x_ref[...], w_ref[...], preferred_element_type=jnp.float32
    ).astype(o_ref.dtype)


def encoder_forward(x, weight, bias, *, max_tile_n=512, max_tile_e=1024,
                    max_tile_k=2048, out_dtype=jnp.float32,
                    small_problem_fallback=True):
    """Pallas-backed Encoder.forward.

    Args:
      x:      (*batch_shape, F) float prepared sample.
      weight: (E, F) float — torch.nn.Linear convention.
      bias:   (E,)   float.

    Returns:
      (*batch_shape, 1, E) — a batch of T=1 tokens of embed_dim E.
      NOTE: operands are computed in bf16 with f32 accumulation, so results
      differ slightly from a pure-f32 torch nn.Linear.
    """
    *batch_shape, feat = x.shape
    embed_dim = weight.shape[0]

    n = 1
    for d in batch_shape:
        n *= d
    n = max(n, 1)

    # Small-problem fast path: fixed ~0.35 us/step Pallas overhead plus the
    # pad/cast/slice HBM round trips dominate tiny shapes; XLA's fused dot is
    # strictly faster there.
    if small_problem_fallback and n * feat * embed_dim < (1 << 20):
        y = x.reshape(n, feat) @ weight.T + bias
        return y.reshape(*batch_shape, 1, embed_dim).astype(out_dtype)

    # ---- lane/sublane/MXU-aligned padded sizes & tile choices -------------
    # K (feature) axis: lane-aligned; with the default max_tile_k the K grid
    # collapses to 1 for typical encoder sizes, so the weight is DMA'd once.
    f_pad = _round_up(feat, 128)
    tile_k = min(max(128, max_tile_k // 128 * 128), f_pad)
    f_pad = _round_up(f_pad, tile_k)

    # E (output) axis: lane-dense stores, tiled so large embed_dims stay under
    # the VMEM budget (v7x: 64 MiB physical / 32 MiB default scoped).
    e_pad = _round_up(embed_dim, 128)
    tile_e = min(max(128, max_tile_e // 128 * 128), e_pad)
    e_pad = _round_up(e_pad, tile_e)

    # N (batch) axis: MXU-M-friendly granule (256 for the 2x256^2 MXU on
    # v6e/v7x) but never below 16 (bf16 sublane packing is (16, 128)).
    granule = 256 if n >= 256 else 16
    tile_n = min(max(granule, max_tile_n // granule * granule),
                 _round_up(n, granule))
    n_pad = _round_up(n, tile_n)

    k_tiles = f_pad // tile_k
    if k_tiles > 1:
        # Accumulate in f32 across K tiles; narrow output dtypes are only
        # safe when the K grid collapses to a single tile.
        out_dtype = jnp.float32

    # ---- plain-JAX glue: flatten, transpose weight once, pad only if needed
    x2d = x.reshape(n, feat)
    if (n_pad, f_pad) != (n, feat):
        x2d = jnp.pad(x2d, ((0, n_pad - n), (0, f_pad - feat)))
    x2d = x2d.astype(jnp.bfloat16)

    # One-time (F, E) transpose of the static weight -> standard K-major
    # contraction on the MXU, no per-tile transposes inside the kernel.
    w_t = weight.T
    if (f_pad, e_pad) != (feat, embed_dim):
        w_t = jnp.pad(w_t, ((0, f_pad - feat), (0, e_pad - embed_dim)))
    w_t = w_t.astype(jnp.bfloat16)

    b_p = bias
    if e_pad != embed_dim:
        b_p = jnp.pad(b_p, (0, e_pad - embed_dim))
    b_p = b_p.astype(jnp.float32).reshape(1, e_pad)

    grid = (n_pad // tile_n, e_pad // tile_e, k_tiles)
    out_bytes = jnp.dtype(out_dtype).itemsize

    # Advisory cost hint so XLA schedules neighbours around this mem-bound op.
    cost = pl.CostEstimate(
        flops=2 * n_pad * e_pad * f_pad,
        transcendentals=0,
        bytes_accessed=(n_pad * f_pad * 2 + f_pad * e_pad * 2
                        + n_pad * e_pad * out_bytes + e_pad * 4),
    )

    # Double-buffered block VMEM estimate; raise the scoped limit only when
    # the defaults (16 MiB v5e / 32 MiB v6e, v7x) would be exceeded, capped at
    # the v7x physical 64 MiB.
    block_bytes = 2 * (tile_n * tile_k * 2 + tile_k * tile_e * 2
                       + tile_n * tile_e * out_bytes + tile_e * 4)
    vmem_limit = None
    if block_bytes > (24 << 20):
        vmem_limit = min(block_bytes + (8 << 20), 64 << 20)

    out = pl.pallas_call(
        _encoder_kernel,
        out_shape=jax.ShapeDtypeStruct((n_pad, e_pad), out_dtype),
        grid_spec=pltpu.PrefetchScalarGridSpec(
            num_scalar_prefetch=0,
            grid=grid,
            in_specs=[
                # x tile: marches over N and K.
                pl.BlockSpec((tile_n, tile_k), lambda i, j, k: (i, k)),
                # weight tile (F, E layout): independent of the N axis; when
                # the K/E grids collapse it is DMA'd once and stays resident.
                pl.BlockSpec((tile_k, tile_e), lambda i, j, k: (k, j)),
                # bias: per-E tile, resident across N and K.
                pl.BlockSpec((1, tile_e), lambda i, j, k: (0, j)),
            ],
            out_specs=pl.BlockSpec((tile_n, tile_e), lambda i, j, k: (i, j)),
        ),
        compiler_params=pltpu.CompilerParams(
            # TODO(synk): on v7x, pltpu.CORE_PARALLEL on the leading axis would
            # shard the grid across both TensorCores; kept portable here.
            dimension_semantics=("parallel", "parallel", "arbitrary"),
            vmem_limit_bytes=vmem_limit,
        ),
        cost_estimate=cost,
    )(x2d, w_t, b_p)

    if (n_pad, e_pad) != (n, embed_dim):
        out = out[:n, :embed_dim]
    # Tokens dimension T = 1, per the Encoder.forward contract.
    return out.reshape(*batch_shape, 1, embed_dim)


# TODO(synk): `prepare`/`unprepare`/`sample`/`device`/`supports` are host-side
# Space plumbing with no tensor compute; they have no Pallas equivalent.


if __name__ == "__main__":
    key = jax.random.PRNGKey(0)
    k_x, k_w, k_b = jax.random.split(key, 3)

    batch = 2
    feat = 16       # flattened observation size (e.g. Box space of dim 16)
    embed_dim = 32

    # Deterministic synthetic parameters (nn.Linear(feat, embed_dim) shapes).
    x = jax.random.normal(k_x, (batch, feat), dtype=jnp.float32)
    weight = jax.random.normal(k_w, (embed_dim, feat), dtype=jnp.float32) * 0.05
    bias = jax.random.normal(k_b, (embed_dim,), dtype=jnp.float32) * 0.01

    # Force the Pallas path (the small-problem fast path would otherwise take
    # over at this tiny size).
    out = encoder_forward(x, weight, bias, small_problem_fallback=False)
    out = jax.block_until_ready(out)

    # Reference (torch Linear contract) on the same bf16-rounded operands with
    # f32 accumulation, matching the kernel's MXU numerics.
    x_bf = x.astype(jnp.bfloat16).astype(jnp.float32)
    w_bf = weight.astype(jnp.bfloat16).astype(jnp.float32)
    ref = (x_bf @ w_bf.T + bias)[:, None, :]
    ref_f32 = (x @ weight.T + bias)[:, None, :]

    assert out.shape == (batch, 1, embed_dim), out.shape
    assert jnp.allclose(out, ref, atol=1e-4, rtol=1e-4), float(
        jnp.max(jnp.abs(out - ref)))
    assert jnp.allclose(out, ref_f32, atol=5e-2, rtol=5e-2)

    # Multi-dim batch shape exercised through the Pallas path as well.
    xb = jax.random.normal(k_x, (2, 3, feat), dtype=jnp.float32)
    out_b = jax.block_until_ready(
        encoder_forward(xb, weight, bias, small_problem_fallback=False))
    ref_b = (xb.reshape(-1, feat) @ weight.T + bias).reshape(2, 3, 1, embed_dim)
    assert out_b.shape == (2, 3, 1, embed_dim), out_b.shape
    assert jnp.allclose(out_b, ref_b, atol=5e-2, rtol=5e-2)

    # The small-problem XLA fast path must agree with the f32 reference.
    out_fast = jax.block_until_ready(encoder_forward(x, weight, bias))
    assert jnp.allclose(out_fast, ref_f32, atol=1e-5, rtol=1e-5)

    print("KERNEL_OK")
</pallas_src>

<mosaic_0001>
module attributes {stable_mosaic.version = 11 : i64} {
  func.func @_encoder_kernel(%arg0: i32, %arg1: i32, %arg2: i32, %arg3: memref<16x128xbf16, #tpu.memory_space<vmem>>, %arg4: memref<128x128xbf16, #tpu.memory_space<vmem>>, %arg5: memref<1x128xf32, #tpu.memory_space<vmem>>, %arg6: memref<16x128xf32, #tpu.memory_space<vmem>>) attributes {dimension_semantics = [#tpu.dimension_semantics<parallel>, #tpu.dimension_semantics<parallel>, #tpu.dimension_semantics<arbitrary>], iteration_bounds = array<i64: 1, 1, 1>, scalar_prefetch = 0 : i64, scratch_operands = 0 : i64, tpu.core_type = #tpu.core_type<tc>, window_params = [{transform_indices = @transform_0, window_bounds = array<i64: 16, 128>}, {transform_indices = @transform_1, window_bounds = array<i64: 128, 128>}, {transform_indices = @transform_2, window_bounds = array<i64: 1, 128>}, {transform_indices = @transform_3, window_bounds = array<i64: 16, 128>}]} {
    %c0_i32 = arith.constant 0 : i32
    %0 = arith.cmpi eq, %arg2, %c0_i32 : i32
    %1 = arith.extui %0 : i1 to i32
    %c0_i32_0 = arith.constant 0 : i32
    %2 = arith.cmpi ne, %1, %c0_i32_0 : i32
    scf.if %2 {
      %c0_8 = arith.constant 0 : index
      %c0_9 = arith.constant 0 : index
      %9 = vector.load %arg5[%c0_8, %c0_9] : memref<1x128xf32, #tpu.memory_space<vmem>>, vector<1x128xf32>
      %10 = vector.shape_cast %9 : vector<1x128xf32> to vector<1x128xf32>
      %11 = vector.broadcast %10 : vector<1x128xf32> to vector<16x128xf32>
      %c0_10 = arith.constant 0 : index
      %c0_11 = arith.constant 0 : index
      %12 = vector.load %arg6[%c0_10, %c0_11] : memref<16x128xf32, #tpu.memory_space<vmem>>, vector<16x128xf32>
      tpu.vector_store %arg6[%c0_10, %c0_11], %11 {strides = array<i32>} : memref<16x128xf32, #tpu.memory_space<vmem>>, vector<16x128xf32>,
    } else {
    }
    %c0 = arith.constant 0 : index
    %c0_1 = arith.constant 0 : index
    %3 = vector.load %arg6[%c0, %c0_1] : memref<16x128xf32, #tpu.memory_space<vmem>>, vector<16x128xf32>
    %c0_2 = arith.constant 0 : index
    %c0_3 = arith.constant 0 : index
    %4 = vector.load %arg3[%c0_2, %c0_3] : memref<16x128xbf16, #tpu.memory_space<vmem>>, vector<16x128xbf16>
    %c0_4 = arith.constant 0 : index
    %c0_5 = arith.constant 0 : index
    %5 = vector.load %arg4[%c0_4, %c0_5] : memref<128x128xbf16, #tpu.memory_space<vmem>>, vector<128x128xbf16>
    %cst = arith.constant dense<0.000000e+00> : vector<16x128xf32>
    %6 = tpu.matmul %4, %5, %cst {dimension_numbers = #tpu.dot_dimension_numbers<[1], [0], [0], [1], [0, 0, 1, 1], [], []>} : vector<16x128xbf16>, vector<128x128xbf16>, vector<16x128xf32> -> vector<16x128xf32>
    %7 = arith.addf %3, %6 : vector<16x128xf32>
    %c0_6 = arith.constant 0 : index
    %c0_7 = arith.constant 0 : index
    %8 = vector.load %arg6[%c0_6, %c0_7] : memref<16x128xf32, #tpu.memory_space<vmem>>, vector<16x128xf32>
    tpu.vector_store %arg6[%c0_6, %c0_7], %7 {strides = array<i32>} : memref<16x128xf32, #tpu.memory_space<vmem>>, vector<16x128xf32>,
    return
  }
  func.func @transform_0(%arg0: i32, %arg1: i32, %arg2: i32) -> (i32, i32) {
    %c0_i32 = arith.constant 0 : i32
    return %arg0, %arg2 : i32, i32
  }
  func.func @transform_1(%arg0: i32, %arg1: i32, %arg2: i32) -> (i32, i32) {
    %c0_i32 = arith.constant 0 : i32
    return %arg2, %arg1 : i32, i32
  }
  func.func @transform_2(%arg0: i32, %arg1: i32, %arg2: i32) -> (i32, i32) {
    %c0_i32 = arith.constant 0 : i32
    %c0_i32_0 = arith.constant 0 : i32
    return %c0_i32, %arg1 : i32, i32
  }
  func.func @transform_3(%arg0: i32, %arg1: i32, %arg2: i32) -> (i32, i32) {
    %c0_i32 = arith.constant 0 : i32
    return %arg0, %arg1 : i32, i32
  }
}

</mosaic_0001>

<llo_original>
// kernel: tpu_custom_call.1
$region0: #{tpu_custom_call.1}
  #allocation0 [shape = 'u32[]', space=smem, size = 0x4, offset = 0x4, fixed_abs, tag = 'smem constant byte address 0x4 - core index']
  #allocation1 [shape = 'u32[144,128]{1,0:T(1,128)}', space=vmem, size = 0x12000, scoped, tag = 'internal scratch']
  %s0 = inlined_call_operand.hbm [shape: bf16[16,128], index: 0, kind: input, shape index: {}]
  %s1 = inlined_call_operand.hbm [shape: bf16[128,128], index: 1, kind: input, shape index: {}]
  %s2 = inlined_call_operand.vmem [shape: f32[1,128], index: 2, kind: input, shape index: {}]
  %s3 = inlined_call_operand.hbm [shape: f32[16,128], index: 3, kind: output, shape index: {}]
  %s4 = sld [smem:[#allocation0]]
  $region34: #{tpu_custom_call.1} parent=0
    _
  %s6 = ssub.s32 1, %s4
  %s7 = scalar_select 0, %s6, %s4
  $region1: #{tpu_custom_call.1} parent=0
    #allocation2 [shape = 'u8[4096]{0}', space=vmem, size = 0x1000, scoped, tag = 'input window, operand 0, single buffered']
    #allocation3 [shape = 's32[1]{0}', space=sflag, size = 0x4, scoped, tag = 'scoped memory for tpu_custom_call.1']
    #allocation4 [shape = 's32[1]{0}', space=sflag, size = 0x4, scoped, tag = 'scoped memory for tpu_custom_call.1']
    #allocation5 [shape = 'u8[32768]{0}', space=vmem, size = 0x8000, scoped, tag = 'input window, operand 1, single buffered']
    #allocation6 [shape = 's32[1]{0}', space=sflag, size = 0x4, scoped, tag = 'scoped memory for tpu_custom_call.1']
    #allocation7 [shape = 'u8[8192]{0}', space=vmem, size = 0x2000, scoped, tag = 'output window, operand 0, single buffered']
    %8 = vsyncpa [#allocation3], 0
    %9 = vsyncpa [#allocation6], 0
    %10 = vsyncpa [#allocation4], 0
    // Predicated region
    $region2: #{tpu_custom_call.1} parent=1 // pred_check
      _
    $region3: #{tpu_custom_call.1} parent=1 // pred_check_branch
      %12 = sbr.rel (0) target = $region5
    $region4: #{tpu_custom_call.1} parent=1 // pred_region
      %s14 = ssub.s32 128, 128
      %15 = vsyncadd [#allocation3], %s14
      %s16 = sshll.u32 [#allocation2], 4
      %s17 = int_to_ptr.vmem [resolvable:$true] %s16
      %22 = dma.hbm_to_vmem [thread:$0]  %s0, 128, %s17, [#allocation3], 64, 64, 4
    $region5: #{tpu_custom_call.1} parent=1 // pred_fallthru
      _
    // Predicated region
    $region6: #{tpu_custom_call.1} parent=1 // pred_check
      _
    $region7: #{tpu_custom_call.1} parent=1 // pred_check_branch
      %24 = sbr.rel (0) target = $region9
    $region8: #{tpu_custom_call.1} parent=1 // pred_region
      %s26 = ssub.s32 1024, 1024
      %27 = vsyncadd [#allocation6], %s26
      %s28 = sshll.u32 [#allocation5], 4
      %s29 = int_to_ptr.vmem [resolvable:$true] %s28
      %34 = dma.hbm_to_vmem [thread:$0]  %s1, 1024, %s29, [#allocation6], 64, 64, 4
    $region9: #{tpu_custom_call.1} parent=1 // pred_fallthru
      _
    // Predicated region
    $region10: #{tpu_custom_call.1} parent=1 // pred_check
      _
    $region11: #{tpu_custom_call.1} parent=1 // pred_check_branch
      %36 = sbr.rel (0) target = $region13
    $region12: #{tpu_custom_call.1} parent=1 // pred_region
      _
    $region13: #{tpu_custom_call.1} parent=1 // pred_fallthru
      _
    // Predicated region
    $region14: #{tpu_custom_call.1} parent=1 // pred_check
      _
    $region15: #{tpu_custom_call.1} parent=1 // pred_check_branch
      %38 = sbr.rel (0) target = $region17
    $region16: #{tpu_custom_call.1} parent=1 // pred_region
      %39 = dma.done [#allocation3], 128
    $region17: #{tpu_custom_call.1} parent=1 // pred_fallthru
      _
    // Predicated region
    $region18: #{tpu_custom_call.1} parent=1 // pred_check
      _
    $region19: #{tpu_custom_call.1} parent=1 // pred_check_branch
      %41 = sbr.rel (0) target = $region21
    $region20: #{tpu_custom_call.1} parent=1 // pred_region
      %42 = dma.done [#allocation6], 1024
    $region21: #{tpu_custom_call.1} parent=1 // pred_fallthru
      _
    %p44 = scmp.eq.s32.totalorder 0, 0
    // Predicated region
    $region22: #{tpu_custom_call.1} parent=1 // pred_check
      %p45 = pneg %p44
    $region23: #{tpu_custom_call.1} parent=1 // pred_check_branch
      %47 = sbr.rel (%p45) target = $region25
    $region24: #{tpu_custom_call.1} parent=1 // pred_region
      %v48 = vld [vmem:[%s2] sm:$0x1]
      %v50 = vlaneseq
      %v51 = vshrl.u32 %v50, 7
      %v52 = vsub.s32 0, %v51
      %v53 = vrot.slane %v48, %v52
      %55 = vst [vmem:[#allocation7] sm:$0xff] %v53
      %56 = vst [vmem:[#allocation7 + $0x8] sm:$0xff] %v53
    $region25: #{tpu_custom_call.1} parent=1 // pred_fallthru
      _
    %v57 = vld [vmem:[#allocation7] sm:$0xff]
    %v58 = vld [vmem:[#allocation7 + $0x8] sm:$0xff]
    %v59 = vld [vmem:[#allocation2] sm:$0xf]
    %v60 = vld [vmem:[#allocation2 + $0x4] sm:$0xf]
    %v61 = vld [vmem:[#allocation5] sm:$0xf]
    %v62 = vld [vmem:[#allocation5 + $0x4] sm:$0xf]
    %v63 = vld [vmem:[#allocation5 + $0x8] sm:$0xf]
    %v64 = vld [vmem:[#allocation5 + $0xc] sm:$0xf]
    %v65 = vld [vmem:[#allocation5 + $0x10] sm:$0xf]
    %v66 = vld [vmem:[#allocation5 + $0x14] sm:$0xf]
    %v67 = vld [vmem:[#allocation5 + $0x18] sm:$0xf]
    %v68 = vld [vmem:[#allocation5 + $0x1c] sm:$0xf]
    %v69 = vld [vmem:[#allocation5 + $0x20] sm:$0xf]
    %v70 = vld [vmem:[#allocation5 + $0x24] sm:$0xf]
    %v71 = vld [vmem:[#allocation5 + $0x28] sm:$0xf]
    %v72 = vld [vmem:[#allocation5 + $0x2c] sm:$0xf]
    %v73 = vld [vmem:[#allocation5 + $0x30] sm:$0xf]
    %v74 = vld [vmem:[#allocation5 + $0x34] sm:$0xf]
    %v75 = vld [vmem:[#allocation5 + $0x38] sm:$0xf]
    %v76 = vld [vmem:[#allocation5 + $0x3c] sm:$0xf]
    %v79 = vunpack.c.l.b16 %v59
    %v80 = vunpack.c.l.b16 %v60
    %v81 = vpack.c.b16 %v80, %v79
    %v99 = vunpack.c.l.b16 %v61
    %v100 = vunpack.c.l.b16 %v62
    %v101 = vunpack.c.l.b16 %v63
    %v102 = vunpack.c.l.b16 %v64
    %v103 = vunpack.c.l.b16 %v65
    %v104 = vunpack.c.l.b16 %v66
    %v105 = vunpack.c.l.b16 %v67
    %v106 = vunpack.c.l.b16 %v68
    %v107 = vunpack.c.l.b16 %v69
    %v108 = vunpack.c.l.b16 %v70
    %v109 = vunpack.c.l.b16 %v71
    %v110 = vunpack.c.l.b16 %v72
    %v111 = vunpack.c.l.b16 %v73
    %v112 = vunpack.c.l.b16 %v74
    %v113 = vunpack.c.l.b16 %v75
    %v114 = vunpack.c.l.b16 %v76
    %v115 = vpack.c.b16 %v100, %v99
    %v116 = vpack.c.b16 %v102, %v101
    %v117 = vpack.c.b16 %v104, %v103
    %v118 = vpack.c.b16 %v106, %v105
    %v119 = vpack.c.b16 %v108, %v107
    %v120 = vpack.c.b16 %v110, %v109
    %v121 = vpack.c.b16 %v112, %v111
    %v122 = vpack.c.b16 %v114, %v113
    %131 = vmatprep.subr.bf16.mxu0 0
    %132 = vmatpush1.bf16.msra.mxu0 %v122
    %133 = vmatprep.subr.bf16.mxu0 0
    %134 = vmatpush1.bf16.msra.mxu0 %v121
    %135 = vmatprep.subr.bf16.mxu0 0
    %136 = vmatpush1.bf16.msra.mxu0 %v120
    %137 = vmatprep.subr.bf16.mxu0 0
    %138 = vmatpush1.bf16.msra.mxu0 %v119
    %139 = vmatprep.subr.bf16.mxu0 0
    %140 = vmatpush1.bf16.msra.mxu0 %v118
    %141 = vmatprep.subr.bf16.mxu0 0
    %142 = vmatpush1.bf16.msra.mxu0 %v117
    %143 = vmatprep.subr.bf16.mxu0 0
    %144 = vmatpush1.bf16.msra.mxu0 %v116
    %145 = vmatprep.subr.bf16.mxu0 0
    %146 = vmatpush1.bf16.msra.mxu0 %v115
    %147 = vmatprep.subr.bf16.mxu0 0
    %148 = vmatpush2.bf16.msra.mxu0 0
    %149 = vmatprep.subr.bf16.mxu0 0
    %150 = vmatpush2.bf16.msra.mxu0 0
    %151 = vmatprep.subr.bf16.mxu0 0
    %152 = vmatpush2.bf16.msra.mxu0 0
    %153 = vmatprep.subr.bf16.mxu0 0
    %154 = vmatpush2.bf16.msra.mxu0 0
    %155 = vmatprep.subr.bf16.mxu0 0
    %156 = vmatpush2.bf16.msra.mxu0 0
    %157 = vmatprep.subr.bf16.mxu0 0
    %158 = vmatpush2.bf16.msra.mxu0 0
    %159 = vmatprep.subr.bf16.mxu0 0
    %160 = vmatpush2.bf16.msra.mxu0 0
    %161 = vmatprep.subr.bf16.mxu0 0
    %162 = vmatpush2.bf16.msra.mxu0 0
    %163 = vmatprep.mubr.bf16.mxu0 0
    %164 = vmatmul.mubr.bf16.gmra.mxu0 %v81
    %v165 = vpop.f32.mrf.mxu0
    %v166 = vadd.f32 0.0, %v165
    %v167 = vpop.f32.mrf.mxu0
    %v168 = vpop.f32.mrf.mxu0
    %v169 = vadd.f32 0.0, %v168
    %v170 = vpop.f32.mrf.mxu0
    %171 = vdwg.mxu0
    %v172 = vadd.f32 %v57, %v166
    %v173 = vadd.f32 %v58, %v169
    %174 = vst [vmem:[#allocation7] sm:$0xff] %v172
    %175 = vst [vmem:[#allocation7 + $0x8] sm:$0xff] %v173
    // Predicated region
    $region26: #{tpu_custom_call.1} parent=1 // pred_check
      _
    $region27: #{tpu_custom_call.1} parent=1 // pred_check_branch
      %177 = sbr.rel (0) target = $region29
    $region28: #{tpu_custom_call.1} parent=1 // pred_region
      %s179 = ssub.s32 256, 256
      %180 = vsyncadd [#allocation4], %s179
      %s181 = sshll.u32 [#allocation7], 4
      %s182 = int_to_ptr.vmem [resolvable:$true] %s181
      %187 = dma.vmem_to_hbm [thread:$0]  %s182, 256, %s3, [#allocation4], 128, 128, 8
    $region29: #{tpu_custom_call.1} parent=1 // pred_fallthru
      _
    // Predicated region
    $region30: #{tpu_custom_call.1} parent=1 // pred_check
      _
    $region31: #{tpu_custom_call.1} parent=1 // pred_check_branch
      %189 = sbr.rel (0) target = $region33
    $region32: #{tpu_custom_call.1} parent=1 // pred_region
      %190 = dma.done [#allocation4], 256
    $region33: #{tpu_custom_call.1} parent=1 // pred_fallthru
      _
    %191 = vsyncpa [#allocation3], 1
    %192 = vsyncpa [#allocation6], 1
    %193 = vsyncpa [#allocation4], 1

</llo_original>
